<compile_context>
chip_gen: v5e
topology: v5e:2x2
jax: 0.10.0
libtpu: 0.0.40
codegen_flags: <defaults>
</compile_context>

<pallas_src>
import functools

import jax
import jax.numpy as jnp
from jax import lax
from jax.experimental import pallas as pl
from jax.experimental.pallas import tpu as pltpu


def _round_up(x, m):
    return ((x + m - 1) // m) * m


def _abs_pow(diff, p):
    """|diff| ** p, specialized at trace time (p is a Python float)."""
    if p == 2.0:
        return diff * diff                       # even power: abs not needed
    if p == 1.0:
        return jnp.abs(diff)
    if float(p).is_integer() and p > 0:
        ip = int(p)
        if ip % 2 == 0:
            return lax.integer_pow(diff, ip)     # even power: abs not needed
        return lax.integer_pow(jnp.abs(diff), ip)
    # Genuinely non-integer p: exp/log (EUP) path -- costs 2 extra EUP ops/element.
    return jnp.abs(diff) ** p


def _r2ccp_kernel(preds_ref, target_ref, mid_ref, out_ref, *, p, tau, batch, need_mask):
    c = pl.program_id(0)          # core-split axis ("parallel")
    j = pl.program_id(1)          # batch-reduction axis ("arbitrary")

    @pl.when(j == 0)
    def _():
        out_ref[...] = jnp.zeros_like(out_ref)

    preds = preds_ref[...].astype(jnp.float32)   # (TB, K)
    target = target_ref[...]                     # (TB, 1) f32
    mid = mid_ref[...]                           # (1, K)  f32

    diff = target - mid                          # (TB, K) broadcast
    dist_p = _abs_pow(diff, p)

    # Fused single pass: preds * (|y-m|^p - tau * log(max(preds, 1e-10)))
    log_p = jnp.log(jnp.maximum(preds, 1e-10))
    combined = preds * (dist_p - tau * log_p)    # (TB, K)

    if need_mask:
        tb, k = preds.shape
        row0 = (c * pl.num_programs(1) + j) * tb
        rows = row0 + lax.broadcasted_iota(jnp.int32, (tb, k), 0)
        combined = jnp.where(rows < batch, combined, 0.0)

    # Sublane-only reduce per step; cross-lane reduce happens once in the wrapper.
    out_ref[...] += jnp.sum(combined, axis=0, keepdims=True)[None]


def r2ccp_loss(preds, target, midpoints, *, p=2.0, tau=0.5, batch_tile=8192):
    """Pallas implementation of R2ccpLoss.forward.

    preds:     (B, K) float32 or bfloat16 (already softmaxed, as in the torch module)
    target:    (B, 1) (or (B,)) float
    midpoints: (K,)   float
    returns scalar float32 loss.
    """
    if preds.shape[0] != target.shape[0]:
        raise IndexError('Batch size mismatch between preds and target.')

    B, K = preds.shape
    target2 = jnp.reshape(target, (B, 1)).astype(jnp.float32)   # tiny, no extra pass on preds
    mid2 = jnp.reshape(midpoints, (1, K)).astype(jnp.float32)

    # --- batch-tile selection (sublane axis): multiple of 8, VMEM-capped, or == B. ---
    lane_k = max(_round_up(K, 128), 128)                 # minor dim padded to lanes in VMEM
    per_row_bytes = 4 * (2 * lane_k + 2 * 128 + 3 * lane_k)   # dbl-buf preds + target + temps
    tb_cap = max(256, ((24 * 1024 * 1024) // per_row_bytes) // 8 * 8)
    TB = max(1, min(int(batch_tile), tb_cap, B))
    if TB < B:
        TB = _round_up(TB, 8)
    if TB >= B:
        TB = B                                           # full dim: always legal

    nsteps_total = pl.cdiv(B, TB)
    num_par = 2 if nsteps_total >= 2 else 1              # split batch across 2 TCs (v7x)
    nsteps_half = pl.cdiv(nsteps_total, num_par)
    num_blocks = num_par * nsteps_half
    need_clamp = num_blocks > nsteps_total               # phantom trailing block on core 1
    need_mask = (num_blocks * TB) != B                   # ragged last block or phantom block
    last_block = nsteps_total - 1

    def batch_idx(c, j):
        b = c * nsteps_half + j
        if need_clamp:
            b = jnp.minimum(b, last_block)               # phantom block re-reads last block,
        return b                                         # fully zeroed by the in-kernel mask

    kernel = functools.partial(
        _r2ccp_kernel, p=float(p), tau=float(tau), batch=B, need_mask=bool(need_mask))

    out = pl.pallas_call(
        kernel,
        out_shape=jax.ShapeDtypeStruct((num_par, 1, K), jnp.float32),
        grid_spec=pltpu.PrefetchScalarGridSpec(
            num_scalar_prefetch=0,
            grid=(num_par, nsteps_half),
            in_specs=[
                pl.BlockSpec((TB, K), lambda c, j: (batch_idx(c, j), 0)),   # preds tile
                pl.BlockSpec((TB, 1), lambda c, j: (batch_idx(c, j), 0)),   # target tile
                pl.BlockSpec((1, K), lambda c, j: (0, 0)),                  # midpoints (resident)
            ],
            out_specs=pl.BlockSpec((1, 1, K), lambda c, j: (c, 0, 0)),      # per-core partial
        ),
        compiler_params=pltpu.CompilerParams(
            dimension_semantics=("parallel", "arbitrary"),
            vmem_limit_bytes=32 * 1024 * 1024,
        ),
    )(preds, target2, mid2)

    return jnp.sum(out)   # tiny (num_par, 1, K) cross-lane reduce in XLA


def r2ccp_loss_ref(preds, target, midpoints, *, p=2.0, tau=0.5):
    """Pure-JAX reference (mirrors the PyTorch forward)."""
    preds = preds.astype(jnp.float32)
    target = target.reshape(-1, 1).astype(jnp.float32)
    abs_diff = jnp.abs(target - midpoints.astype(jnp.float32)[None, :])
    ce = jnp.sum(abs_diff ** p * preds, axis=1)
    sh = jnp.sum(preds * jnp.log(jnp.maximum(preds, 1e-10)), axis=1)
    return jnp.sum(ce - tau * sh)


if __name__ == "__main__":
    key = jax.random.PRNGKey(0)
    k1, k2, k3, k4, k5, k6 = jax.random.split(key, 6)

    # --- small case matching the module shapes: (B, K) preds, (B, 1) target ---
    B, K = 8, 16
    logits = jax.random.normal(k1, (B, K), dtype=jnp.float32)
    preds = jax.nn.softmax(logits, axis=1)                      # (B, K)
    target = jax.random.uniform(k2, (B, 1), dtype=jnp.float32)  # (B, 1)
    midpoints = jnp.linspace(0.05, 0.95, K, dtype=jnp.float32)  # (K,)

    loss = r2ccp_loss(preds, target, midpoints, p=2.0, tau=0.5)
    loss = jax.block_until_ready(loss)
    ref = r2ccp_loss_ref(preds, target, midpoints, p=2.0, tau=0.5)
    assert jnp.allclose(loss, ref, rtol=1e-5, atol=1e-5), (loss, ref)

    # --- ragged multi-tile grid + 2-way core split + odd integer p ---
    B2, K2 = 300, 16
    logits2 = jax.random.normal(k3, (B2, K2), dtype=jnp.float32)
    preds2 = jax.nn.softmax(logits2, axis=1)
    target2 = jax.random.uniform(k4, (B2, 1), dtype=jnp.float32)
    mid2 = jnp.linspace(0.05, 0.95, K2, dtype=jnp.float32)

    loss2 = r2ccp_loss(preds2, target2, mid2, p=3.0, tau=0.25, batch_tile=64)
    loss2 = jax.block_until_ready(loss2)
    ref2 = r2ccp_loss_ref(preds2, target2, mid2, p=3.0, tau=0.25)
    assert jnp.allclose(loss2, ref2, rtol=1e-5, atol=1e-4), (loss2, ref2)

    # --- bf16 preds, K not a multiple of 8 ---
    B3, K3 = 64, 50
    logits3 = jax.random.normal(k5, (B3, K3), dtype=jnp.float32)
    preds3 = jax.nn.softmax(logits3, axis=1).astype(jnp.bfloat16)
    target3 = jax.random.uniform(k6, (B3, 1), dtype=jnp.float32)
    mid3 = jnp.linspace(0.05, 0.95, K3, dtype=jnp.float32)

    loss3 = r2ccp_loss(preds3, target3, mid3, p=2.0, tau=0.5, batch_tile=32)
    loss3 = jax.block_until_ready(loss3)
    ref3 = r2ccp_loss_ref(preds3, target3, mid3, p=2.0, tau=0.5)
    assert jnp.allclose(loss3, ref3, rtol=1e-4, atol=1e-4), (loss3, ref3)

    print("KERNEL_OK")
</pallas_src>

<mosaic_0001>
module attributes {stable_mosaic.version = 11 : i64} {
  func.func @_r2ccp_kernel(%arg0: i32, %arg1: i32, %arg2: memref<8x16xf32, #tpu.memory_space<vmem>>, %arg3: memref<8x1xf32, #tpu.memory_space<vmem>>, %arg4: memref<1x16xf32, #tpu.memory_space<vmem>>, %arg5: memref<1x1x16xf32, #tpu.memory_space<vmem>>) attributes {dimension_semantics = [#tpu.dimension_semantics<parallel>, #tpu.dimension_semantics<arbitrary>], iteration_bounds = array<i64: 1, 1>, scalar_prefetch = 0 : i64, scratch_operands = 0 : i64, tpu.core_type = #tpu.core_type<tc>, window_params = [{transform_indices = @transform_0, window_bounds = array<i64: 8, 16>}, {transform_indices = @transform_1, window_bounds = array<i64: 8, 1>}, {pipeline_mode = #tpu.pipeline_mode<synchronous>, transform_indices = @transform_2, window_bounds = array<i64: 1, 16>}, {transform_indices = @transform_3, window_bounds = array<i64: 1, 1, 16>}]} {
    %c0_i32 = arith.constant 0 : i32
    %0 = arith.cmpi eq, %arg1, %c0_i32 : i32
    %1 = arith.extui %0 : i1 to i32
    %c0_i32_0 = arith.constant 0 : i32
    %2 = arith.cmpi ne, %1, %c0_i32_0 : i32
    scf.if %2 {
      %cst_14 = arith.constant 0.000000e+00 : f32
      %23 = vector.broadcast %cst_14 : f32 to vector<1x1x16xf32>
      %c0_15 = arith.constant 0 : index
      %c0_16 = arith.constant 0 : index
      %c0_17 = arith.constant 0 : index
      %24 = vector.load %arg5[%c0_15, %c0_16, %c0_17] : memref<1x1x16xf32, #tpu.memory_space<vmem>>, vector<1x1x16xf32>
      tpu.vector_store %arg5[%c0_15, %c0_16, %c0_17], %23 {strides = array<i32>} : memref<1x1x16xf32, #tpu.memory_space<vmem>>, vector<1x1x16xf32>,
    } else {
    }
    %c0 = arith.constant 0 : index
    %c0_1 = arith.constant 0 : index
    %3 = vector.load %arg2[%c0, %c0_1] : memref<8x16xf32, #tpu.memory_space<vmem>>, vector<8x16xf32>
    %c0_2 = arith.constant 0 : index
    %c0_3 = arith.constant 0 : index
    %4 = vector.load %arg3[%c0_2, %c0_3] : memref<8x1xf32, #tpu.memory_space<vmem>>, vector<8x1xf32>
    %c0_4 = arith.constant 0 : index
    %c0_5 = arith.constant 0 : index
    %5 = vector.load %arg4[%c0_4, %c0_5] : memref<1x16xf32, #tpu.memory_space<vmem>>, vector<1x16xf32>
    %6 = vector.broadcast %4 : vector<8x1xf32> to vector<8x16xf32>
    %7 = vector.broadcast %5 : vector<1x16xf32> to vector<8x16xf32>
    %8 = arith.subf %6, %7 : vector<8x16xf32>
    %9 = arith.mulf %8, %8 : vector<8x16xf32>
    %cst = arith.constant 1.000000e-10 : f32
    %10 = vector.broadcast %cst : f32 to vector<8x16xf32>
    %11 = arith.maximumf %3, %10 : vector<8x16xf32>
    %12 = math.log %11 : vector<8x16xf32>
    %cst_6 = arith.constant 5.000000e-01 : f32
    %13 = vector.broadcast %cst_6 : f32 to vector<8x16xf32>
    %14 = arith.mulf %13, %12 : vector<8x16xf32>
    %15 = arith.subf %9, %14 : vector<8x16xf32>
    %16 = arith.mulf %3, %15 : vector<8x16xf32>
    %c0_7 = arith.constant 0 : index
    %c0_8 = arith.constant 0 : index
    %c0_9 = arith.constant 0 : index
    %17 = vector.load %arg5[%c0_7, %c0_8, %c0_9] : memref<1x1x16xf32, #tpu.memory_space<vmem>>, vector<1x1x16xf32>
    %cst_10 = arith.constant dense<0.000000e+00> : vector<16xf32>
    %18 = vector.multi_reduction <add>, %16, %cst_10 [0] : vector<8x16xf32> to vector<16xf32>
    %19 = vector.shape_cast %18 : vector<16xf32> to vector<1x16xf32>
    %20 = vector.shape_cast %19 : vector<1x16xf32> to vector<1x1x16xf32>
    %21 = arith.addf %17, %20 : vector<1x1x16xf32>
    %c0_11 = arith.constant 0 : index
    %c0_12 = arith.constant 0 : index
    %c0_13 = arith.constant 0 : index
    %22 = vector.load %arg5[%c0_11, %c0_12, %c0_13] : memref<1x1x16xf32, #tpu.memory_space<vmem>>, vector<1x1x16xf32>
    tpu.vector_store %arg5[%c0_11, %c0_12, %c0_13], %21 {strides = array<i32>} : memref<1x1x16xf32, #tpu.memory_space<vmem>>, vector<1x1x16xf32>,
    return
  }
  func.func @transform_0(%arg0: i32, %arg1: i32) -> (i32, i32) {
    %c1_i32 = arith.constant 1 : i32
    %0 = arith.muli %arg0, %c1_i32 : i32
    %1 = arith.addi %0, %arg1 : i32
    %c0_i32 = arith.constant 0 : i32
    %c0_i32_0 = arith.constant 0 : i32
    return %1, %c0_i32 : i32, i32
  }
  func.func @transform_1(%arg0: i32, %arg1: i32) -> (i32, i32) {
    %c1_i32 = arith.constant 1 : i32
    %0 = arith.muli %arg0, %c1_i32 : i32
    %1 = arith.addi %0, %arg1 : i32
    %c0_i32 = arith.constant 0 : i32
    %c0_i32_0 = arith.constant 0 : i32
    return %1, %c0_i32 : i32, i32
  }
  func.func @transform_2(%arg0: i32, %arg1: i32) -> (i32, i32) {
    %c0_i32 = arith.constant 0 : i32
    %c0_i32_0 = arith.constant 0 : i32
    %c0_i32_1 = arith.constant 0 : i32
    return %c0_i32, %c0_i32_0 : i32, i32
  }
  func.func @transform_3(%arg0: i32, %arg1: i32) -> (i32, i32, i32) {
    %c0_i32 = arith.constant 0 : i32
    %c0_i32_0 = arith.constant 0 : i32
    %c0_i32_1 = arith.constant 0 : i32
    return %arg0, %c0_i32, %c0_i32_0 : i32, i32, i32
  }
}

</mosaic_0001>

<llo_original>
// kernel: tpu_custom_call.1
$region0: #{tpu_custom_call.1}
  #allocation0 [shape = 'u32[]', space=smem, size = 0x4, offset = 0x4, fixed_abs, tag = 'smem constant byte address 0x4 - core index']
  #allocation1 [shape = 'u32[72,128]{1,0:T(1,128)}', space=vmem, size = 0x9000, scoped, tag = 'internal scratch']
  %s0 = inlined_call_operand.vmem [shape: f32[8,16], index: 0, kind: input, shape index: {}]
  %s1 = inlined_call_operand.vmem [shape: f32[8,1], index: 1, kind: input, shape index: {}]
  %s2 = inlined_call_operand.vmem [shape: f32[1,16], index: 2, kind: input, shape index: {}]
  %s3 = inlined_call_operand.hbm [shape: f32[1,1,16], index: 3, kind: output, shape index: {}]
  %s4 = sld [smem:[#allocation0]]
  $region26: #{tpu_custom_call.1} parent=0
    _
  %s6 = ssub.s32 1, %s4
  %s7 = scalar_select 0, %s6, %s4
  $region1: #{tpu_custom_call.1} parent=0
    #allocation2 [shape = 'u8[512]{0}', space=vmem, size = 0x400, scoped, tag = 'output window, operand 0, single buffered']
    #allocation3 [shape = 's32[1]{0}', space=sflag, size = 0x4, scoped, tag = 'scoped memory for tpu_custom_call.1']
    %8 = vsyncpa [#allocation3], 0
    // Predicated region
    $region2: #{tpu_custom_call.1} parent=1 // pred_check
      _
    $region3: #{tpu_custom_call.1} parent=1 // pred_check_branch
      %10 = sbr.rel (0) target = $region5
    $region4: #{tpu_custom_call.1} parent=1 // pred_region
      %s11 = sadd.s32 0, 0
      %p12 = scmp.lt.s32.totalorder %s11, 0
      %s13 = scalar_select %p12, %s11, 0
      %s14 = smul.addr %s13, 8
      %s15 = scalar_lea.vmem %s0, %s14
      %s16 = sadd.s32 0, 0
    $region5: #{tpu_custom_call.1} parent=1 // pred_fallthru
      _
    // Predicated region
    $region6: #{tpu_custom_call.1} parent=1 // pred_check
      _
    $region7: #{tpu_custom_call.1} parent=1 // pred_check_branch
      %18 = sbr.rel (0) target = $region9
    $region8: #{tpu_custom_call.1} parent=1 // pred_region
      %s19 = sadd.s32 0, 0
      %p20 = scmp.lt.s32.totalorder %s19, 0
      %s21 = scalar_select %p20, %s19, 0
      %s22 = smul.addr %s21, 8
      %s23 = scalar_lea.vmem %s1, %s22
      %s24 = sadd.s32 0, 0
    $region9: #{tpu_custom_call.1} parent=1 // pred_fallthru
      _
    // Predicated region
    $region10: #{tpu_custom_call.1} parent=1 // pred_check
      _
    $region11: #{tpu_custom_call.1} parent=1 // pred_check_branch
      %26 = sbr.rel (0) target = $region13
    $region12: #{tpu_custom_call.1} parent=1 // pred_region
      _
    $region13: #{tpu_custom_call.1} parent=1 // pred_fallthru
      _
    %s27 = sadd.s32 0, 0
    %p28 = scmp.lt.s32.totalorder %s27, 0
    %s29 = scalar_select %p28, %s27, 0
    %s30 = smul.addr %s29, 8
    %s31 = scalar_lea.vmem %s0, %s30
    %s32 = sadd.s32 0, 0
    %p33 = scmp.lt.s32.totalorder %s32, 0
    %s34 = scalar_select %p33, %s32, 0
    %s35 = smul.addr %s34, 8
    %s36 = scalar_lea.vmem %s1, %s35
    %s37 = sadd.s32 0, 0
    %p38 = scmp.lt.s32.totalorder %s37, 0
    %s39 = scalar_select %p38, %s37, 0
    %s40 = smul.addr %s39, 8
    %s41 = scalar_lea.vmem %s0, %s40
    %s42 = sadd.s32 0, 0
    %s43 = sadd.s32 0, 0
    %p44 = scmp.lt.s32.totalorder %s43, 0
    %s45 = scalar_select %p44, %s43, 0
    %s46 = smul.addr %s45, 8
    %s47 = scalar_lea.vmem %s1, %s46
    %s48 = sadd.s32 0, 0
    %p49 = scmp.eq.s32.totalorder 0, 0
    // Predicated region
    $region14: #{tpu_custom_call.1} parent=1 // pred_check
      %p50 = pneg %p49
    $region15: #{tpu_custom_call.1} parent=1 // pred_check_branch
      %52 = sbr.rel (%p50) target = $region17
    $region16: #{tpu_custom_call.1} parent=1 // pred_region
      %vm53 = vcmask 122880
      %54 = vst.msk [vmem:[#allocation2] sm:$0x1] %vm53, 0.0
    $region17: #{tpu_custom_call.1} parent=1 // pred_fallthru
      _
    %v55 = vld [vmem:[%s41] sm:$0xff]
    %v56 = vld [vmem:[%s47] sm:$0xff]
    %v57 = vld [vmem:[%s2] sm:$0x1]
    %59 = vset.pattern.permute.xlu0 0
    %60 = vperm.xlu0 %59, %v56
    %v61 = vpop.permute.xlu0 %60
    %v64 = vperm.slane %v57, 0
    %v66 = vsub.f32 %v61, %v64
    %v67 = vmul.f32 %v66, %v66
    %v68 = vmax.f32 %v55, 1e-10
    %v69 = vlog2.pop %v68
    %v70 = vmul.f32 %v69, 0.6931472
    %v71 = vmul.f32 %v70, 0.5
    %v72 = vsub.f32 %v67, %v71
    %v73 = vmul.f32 %v55, %v72
    %v74 = vld [vmem:[#allocation2] sm:$0x1]
    %vm75 = vcmask 130048
    %v76 = vsel %vm75, %v73, 0.0
    %v77 = vrot.slane %v76, 4
    %v78 = vadd.f32 %v76, %v77
    %v79 = vrot.slane %v78, 2
    %v80 = vadd.f32 %v78, %v79
    %v81 = vrot.slane %v80, 1
    %v82 = vadd.f32 %v80, %v81
    %v83 = vadd.f32 %v74, %v82
    %vm84 = vcmask 122880
    %85 = vst.msk [vmem:[#allocation2] sm:$0x1] %vm84, %v83
    // Predicated region
    $region18: #{tpu_custom_call.1} parent=1 // pred_check
      _
    $region19: #{tpu_custom_call.1} parent=1 // pred_check_branch
      %87 = sbr.rel (0) target = $region21
    $region20: #{tpu_custom_call.1} parent=1 // pred_region
      %89 = vsyncadd [#allocation3], 0
      %s91 = sshll.u32 [#allocation2], 4
      %s92 = int_to_ptr.vmem [resolvable:$true] %s91
      %s93 = sshll.u32 %s3, 4
      %s94 = int_to_ptr.hbm [resolvable:$true] %s93
      %96 = dma.vmem_to_hbm [thread:$0]  %s92, 16, %s94, [#allocation3]
    $region21: #{tpu_custom_call.1} parent=1 // pred_fallthru
      _
    // Predicated region
    $region22: #{tpu_custom_call.1} parent=1 // pred_check
      _
    $region23: #{tpu_custom_call.1} parent=1 // pred_check_branch
      %98 = sbr.rel (0) target = $region25
    $region24: #{tpu_custom_call.1} parent=1 // pred_region
      %100 = dma.done [#allocation3], 16
    $region25: #{tpu_custom_call.1} parent=1 // pred_fallthru
      _
    %101 = vsyncpa [#allocation3], 1

</llo_original>
